<compile_context>
chip_gen: v5e
topology: v5e:2x2
jax: 0.10.0
libtpu: 0.0.40
codegen_flags: <defaults>
</compile_context>

<pallas_src>
import functools

import jax
import jax.numpy as jnp
from jax.experimental import pallas as pl
from jax.experimental.pallas import tpu as pltpu


def _resblock_kernel(x_ref, w_ref, b_ref, o_ref):
    """One (row-tile, out-col-slab): o = x[:, cols] + silu(x @ W_t[:, cols] + b[cols])."""
    tn = o_ref.shape[-1]
    col = pl.multiple_of(pl.program_id(1) * tn, 128)

    x = x_ref[...]                                   # (tm, Hp)  native dtype -> MXU
    w = w_ref[...]                                   # (Hp, tn)  pre-transposed
    h = jnp.dot(x, w, preferred_element_type=jnp.float32)        # f32 accumulator
    h = h + b_ref[...].astype(jnp.float32)
    act = h * jax.nn.sigmoid(h)                      # SiLU in f32 (VPU + EUP)

    x_res = x_ref[:, pl.ds(col, tn)].astype(jnp.float32)         # residual slice
    o_ref[...] = (x_res + act).astype(o_ref.dtype)


def _round_up(n, m):
    return (n + m - 1) // m * m


@functools.partial(jax.jit, static_argnames=("tm",))
def resblock_pallas(x, weight, bias, *, tm=256):
    """x: [..., H]; weight: [H, H] (out, in) like torch.nn.Linear; bias: [H]."""
    orig_shape = x.shape
    H = orig_shape[-1]
    x2 = x.reshape(-1, H)                            # [N, H]
    N = x2.shape[0]

    # Lane-dense hidden dim and 8-aligned row tile: pad, run, slice back.
    H_pad = _round_up(H, 128)
    tm_eff = min(tm, _round_up(N, 8))
    N_pad = _round_up(N, tm_eff)

    # Out-feature slab: largest of {512, 256, 128} dividing the padded hidden.
    if H_pad % 512 == 0:
        tn = 512
    elif H_pad % 256 == 0:
        tn = 256
    else:
        tn = 128

    # Pre-transpose once (wrapper-side, one XLA op) instead of w.T every step.
    w_t = weight.T                                   # (in, out)

    x_p = jnp.pad(x2, ((0, N_pad - N), (0, H_pad - H)))
    w_p = jnp.pad(w_t, ((0, H_pad - H), (0, H_pad - H)))
    b_p = jnp.pad(bias, (0, H_pad - H)).reshape(1, H_pad)

    grid = (N_pad // tm_eff, H_pad // tn)

    # Rough double-buffered VMEM budget; keep the scoped limit under ~48 MiB so
    # the same tiling also fits v7x's 64 MiB physical VMEM.
    est = 2 * (tm_eff * H_pad * x_p.dtype.itemsize      # x row tile
               + H_pad * tn * w_p.dtype.itemsize        # weight slab
               + H_pad * b_p.dtype.itemsize             # bias slab
               + tm_eff * tn * x.dtype.itemsize)        # out tile
    vmem_limit = int(min(max(est + (4 << 20), 32 << 20), 48 << 20))

    # TODO(synk): for hidden sizes where a (H_pad, tn) f32 weight slab no longer
    # fits comfortably (H >> 8k), add a K grid axis marked "arbitrary" with an
    # f32 VMEM accumulator and pl.when init/finalize.

    out = pl.pallas_call(
        _resblock_kernel,
        out_shape=jax.ShapeDtypeStruct((N_pad, H_pad), x.dtype),
        grid_spec=pltpu.PrefetchScalarGridSpec(
            num_scalar_prefetch=0,
            grid=grid,
            in_specs=[
                # x row tile: constant block index along j (inner axis) -> DMAed
                # once per row tile, resident while weight slabs stream.
                pl.BlockSpec((tm_eff, H_pad), lambda i, j: (i, 0)),
                pl.BlockSpec((H_pad, tn), lambda i, j: (0, j)),   # weight slab
                pl.BlockSpec((1, tn), lambda i, j: (0, j)),       # bias slab
            ],
            out_specs=pl.BlockSpec((tm_eff, tn), lambda i, j: (i, j)),
        ),
        compiler_params=pltpu.CompilerParams(
            dimension_semantics=("parallel", "parallel"),
            vmem_limit_bytes=vmem_limit,
        ),
    )(x_p, w_p, b_p)

    return out[:N, :H].reshape(orig_shape)


if __name__ == "__main__":
    batch, seq, hidden = 2, 8, 32

    key = jax.random.PRNGKey(0)
    kx, kb = jax.random.split(key)

    x = jax.random.normal(kx, (batch, seq, hidden), dtype=jnp.float32)

    # Parameters per the module's __init__: zero-initialized weight,
    # torch-default uniform(-1/sqrt(H), 1/sqrt(H)) bias.
    weight = jnp.zeros((hidden, hidden), dtype=jnp.float32)
    bound = 1.0 / (hidden ** 0.5)
    bias = jax.random.uniform(kb, (hidden,), dtype=jnp.float32,
                              minval=-bound, maxval=bound)

    out = resblock_pallas(x, weight, bias)
    out = jax.block_until_ready(out)

    # Plain-JAX reference.
    h_ref = x @ weight.T + bias
    ref = x + h_ref * jax.nn.sigmoid(h_ref)
    assert out.shape == x.shape
    assert jnp.allclose(out, ref, atol=1e-5, rtol=1e-5)

    print("KERNEL_OK")
</pallas_src>

<mosaic_0001>
module attributes {stable_mosaic.version = 11 : i64} {
  func.func @_resblock_kernel(%arg0: i32, %arg1: i32, %arg2: memref<16x128xf32, #tpu.memory_space<vmem>>, %arg3: memref<128x128xf32, #tpu.memory_space<vmem>>, %arg4: memref<1x128xf32, #tpu.memory_space<vmem>>, %arg5: memref<16x128xf32, #tpu.memory_space<vmem>>) attributes {dimension_semantics = [#tpu.dimension_semantics<parallel>, #tpu.dimension_semantics<parallel>], iteration_bounds = array<i64: 1, 1>, scalar_prefetch = 0 : i64, scratch_operands = 0 : i64, tpu.core_type = #tpu.core_type<tc>, window_params = [{transform_indices = @transform_0, window_bounds = array<i64: 16, 128>}, {transform_indices = @transform_1, window_bounds = array<i64: 128, 128>}, {transform_indices = @transform_2, window_bounds = array<i64: 1, 128>}, {transform_indices = @transform_3, window_bounds = array<i64: 16, 128>}]} {
    %c128_i32 = arith.constant 128 : i32
    %0 = arith.muli %arg1, %c128_i32 : i32
    %1 = tpu.assume_multiple %0, 128 : i32
    %c0 = arith.constant 0 : index
    %c0_0 = arith.constant 0 : index
    %2 = vector.load %arg2[%c0, %c0_0] : memref<16x128xf32, #tpu.memory_space<vmem>>, vector<16x128xf32>
    %c0_1 = arith.constant 0 : index
    %c0_2 = arith.constant 0 : index
    %3 = vector.load %arg3[%c0_1, %c0_2] : memref<128x128xf32, #tpu.memory_space<vmem>>, vector<128x128xf32>
    %cst = arith.constant dense<0.000000e+00> : vector<16x128xf32>
    %4 = tpu.matmul %2, %3, %cst {dimension_numbers = #tpu.dot_dimension_numbers<[1], [0], [0], [1], [0, 0, 1, 1], [], []>} : vector<16x128xf32>, vector<128x128xf32>, vector<16x128xf32> -> vector<16x128xf32>
    %c0_3 = arith.constant 0 : index
    %c0_4 = arith.constant 0 : index
    %5 = vector.load %arg4[%c0_3, %c0_4] : memref<1x128xf32, #tpu.memory_space<vmem>>, vector<1x128xf32>
    %6 = vector.broadcast %5 : vector<1x128xf32> to vector<16x128xf32>
    %7 = arith.addf %4, %6 : vector<16x128xf32>
    %8 = arith.negf %7 : vector<16x128xf32>
    %9 = math.exp %8 : vector<16x128xf32>
    %cst_5 = arith.constant 1.000000e+00 : f32
    %10 = vector.broadcast %cst_5 : f32 to vector<16x128xf32>
    %11 = arith.addf %10, %9 : vector<16x128xf32>
    %12 = arith.divf %10, %11 : vector<16x128xf32>
    %13 = arith.mulf %7, %12 : vector<16x128xf32>
    %c0_6 = arith.constant 0 : index
    %14 = arith.index_cast %1 : i32 to index
    %15 = vector.load %arg2[%c0_6, %14] : memref<16x128xf32, #tpu.memory_space<vmem>>, vector<16x128xf32>
    %16 = arith.addf %15, %13 : vector<16x128xf32>
    %c0_7 = arith.constant 0 : index
    %c0_8 = arith.constant 0 : index
    %17 = vector.load %arg5[%c0_7, %c0_8] : memref<16x128xf32, #tpu.memory_space<vmem>>, vector<16x128xf32>
    tpu.vector_store %arg5[%c0_7, %c0_8], %16 {strides = array<i32>} : memref<16x128xf32, #tpu.memory_space<vmem>>, vector<16x128xf32>,
    return
  }
  func.func @transform_0(%arg0: i32, %arg1: i32) -> (i32, i32) {
    %c0_i32 = arith.constant 0 : i32
    %c0_i32_0 = arith.constant 0 : i32
    return %arg0, %c0_i32 : i32, i32
  }
  func.func @transform_1(%arg0: i32, %arg1: i32) -> (i32, i32) {
    %c0_i32 = arith.constant 0 : i32
    %c0_i32_0 = arith.constant 0 : i32
    return %c0_i32, %arg1 : i32, i32
  }
  func.func @transform_2(%arg0: i32, %arg1: i32) -> (i32, i32) {
    %c0_i32 = arith.constant 0 : i32
    %c0_i32_0 = arith.constant 0 : i32
    return %c0_i32, %arg1 : i32, i32
  }
  func.func @transform_3(%arg0: i32, %arg1: i32) -> (i32, i32) {
    %c0_i32 = arith.constant 0 : i32
    return %arg0, %arg1 : i32, i32
  }
}

</mosaic_0001>

<llo_original>
// kernel: resblock_pallas.1
$region0: #{resblock_pallas.1}
  #allocation0 [shape = 'u32[]', space=smem, size = 0x4, offset = 0x4, fixed_abs, tag = 'smem constant byte address 0x4 - core index']
  #allocation1 [shape = 'u32[72,128]{1,0:T(1,128)}', space=vmem, size = 0x9000, scoped, tag = 'internal scratch']
  %s0 = inlined_call_operand.vmem [shape: f32[16,128], index: 0, kind: input, shape index: {}]
  %s1 = inlined_call_operand.vmem [shape: f32[128,128], index: 1, kind: input, shape index: {}]
  %s2 = inlined_call_operand.vmem [shape: f32[1,128], index: 2, kind: input, shape index: {}]
  %s3 = inlined_call_operand.vmem [shape: f32[16,128], index: 3, kind: output, shape index: {}]
  %s4 = sld [smem:[#allocation0]]
  $region22: #{resblock_pallas.1} parent=0
    _
  %s6 = ssub.s32 1, %s4
  %s7 = scalar_select 0, %s6, %s4
  // Predicated region
  $region2: #{resblock_pallas.1} parent=0 // pred_check
    _
  $region3: #{resblock_pallas.1} parent=0 // pred_check_branch
    %9 = sbr.rel (0) target = $region5
  $region4: #{resblock_pallas.1} parent=0 // pred_region
    _
  $region5: #{resblock_pallas.1} parent=0 // pred_fallthru
    _
  // Predicated region
  $region6: #{resblock_pallas.1} parent=0 // pred_check
    _
  $region7: #{resblock_pallas.1} parent=0 // pred_check_branch
    %11 = sbr.rel (0) target = $region9
  $region8: #{resblock_pallas.1} parent=0 // pred_region
    _
  $region9: #{resblock_pallas.1} parent=0 // pred_fallthru
    _
  // Predicated region
  $region10: #{resblock_pallas.1} parent=0 // pred_check
    _
  $region11: #{resblock_pallas.1} parent=0 // pred_check_branch
    %13 = sbr.rel (0) target = $region13
  $region12: #{resblock_pallas.1} parent=0 // pred_region
    _
  $region13: #{resblock_pallas.1} parent=0 // pred_fallthru
    _
  %s14 = smul.u32 0, 128
  %v15 = vld [vmem:[%s0] sm:$0xff]
  %v16 = vld [vmem:[%s0 + $0x8] sm:$0xff]
  %v17 = vld [vmem:[%s1] sm:$0xff]
  %v18 = vld [vmem:[%s1 + $0x8] sm:$0xff]
  %v19 = vld [vmem:[%s1 + $0x10] sm:$0xff]
  %v20 = vld [vmem:[%s1 + $0x18] sm:$0xff]
  %v21 = vld [vmem:[%s1 + $0x20] sm:$0xff]
  %v22 = vld [vmem:[%s1 + $0x28] sm:$0xff]
  %v23 = vld [vmem:[%s1 + $0x30] sm:$0xff]
  %v24 = vld [vmem:[%s1 + $0x38] sm:$0xff]
  %v25 = vld [vmem:[%s1 + $0x40] sm:$0xff]
  %v26 = vld [vmem:[%s1 + $0x48] sm:$0xff]
  %v27 = vld [vmem:[%s1 + $0x50] sm:$0xff]
  %v28 = vld [vmem:[%s1 + $0x58] sm:$0xff]
  %v29 = vld [vmem:[%s1 + $0x60] sm:$0xff]
  %v30 = vld [vmem:[%s1 + $0x68] sm:$0xff]
  %v31 = vld [vmem:[%s1 + $0x70] sm:$0xff]
  %v32 = vld [vmem:[%s1 + $0x78] sm:$0xff]
  %v33 = vld [vmem:[%s2] sm:$0x1]
  %v35 = vperm.slane %v33, 0
  %37 = vmatpush.msra.mxu0 %v32
  %38 = vmatpush.msra.mxu0 %v31
  %39 = vmatpush.msra.mxu0 %v30
  %40 = vmatpush.msra.mxu0 %v29
  %41 = vmatpush.msra.mxu0 %v28
  %42 = vmatpush.msra.mxu0 %v27
  %43 = vmatpush.msra.mxu0 %v26
  %44 = vmatpush.msra.mxu0 %v25
  %45 = vmatpush.msra.mxu0 %v24
  %46 = vmatpush.msra.mxu0 %v23
  %47 = vmatpush.msra.mxu0 %v22
  %48 = vmatpush.msra.mxu0 %v21
  %49 = vmatpush.msra.mxu0 %v20
  %50 = vmatpush.msra.mxu0 %v19
  %51 = vmatpush.msra.mxu0 %v18
  %52 = vmatpush.msra.mxu0 %v17
  %53 = vmatmul.f32.gmra.mxu0 %v15
  %v54 = vpop.f32.mrf.mxu0
  %v55 = vadd.f32 %v35, %v54
  %56 = vmatmul.f32.gmra.mxu0 %v16
  %v57 = vpop.f32.mrf.mxu0
  %v58 = vadd.f32 %v35, %v57
  %59 = vdwg.mxu0
  %v60 = vxor.u32 %v55, 2147483648
  %v61 = vxor.u32 %v58, 2147483648
  %v62 = vmul.f32 %v60, 1.442695
  %v63 = vpow.pop %v62
  %v64 = vmul.f32 %v61, 1.442695
  %v65 = vpow.pop %v64
  %v66 = vadd.f32 %v63, 1.0
  %v67 = vadd.f32 %v65, 1.0
  %v68 = vrcp.pop %v66
  %v69 = vmul.f32 %v66, %v68
  %v70 = vsub.f32 1.0, %v69
  %v71 = vmul.f32 %v68, %v70
  %v72 = vadd.f32 %v68, %v71
  %vm73 = vweird.f32 %v66
  %vm74 = vweird.f32 %v68
  %vm75 = vmor %vm73, %vm74
  %v76 = vsel %vm75, %v68, %v72
  %v77 = vand.u32 2147483647, %v66
  %vm78 = vcmp.eq.f32.partialorder %v77, 8.507059e+37
  %v79 = vand.u32 %v66, 2147483648
  %v80 = vor.u32 1.1754944e-38, %v79
  %v81 = vsel %vm78, %v80, %v76
  %v82 = vmul.f32 1.0, %v81
  %v83 = vrcp.pop %v67
  %v84 = vmul.f32 %v67, %v83
  %v85 = vsub.f32 1.0, %v84
  %v86 = vmul.f32 %v83, %v85
  %v87 = vadd.f32 %v83, %v86
  %vm88 = vweird.f32 %v67
  %vm89 = vweird.f32 %v83
  %vm90 = vmor %vm88, %vm89
  %v91 = vsel %vm90, %v83, %v87
  %v92 = vand.u32 2147483647, %v67
  %vm93 = vcmp.eq.f32.partialorder %v92, 8.507059e+37
  %v94 = vand.u32 %v67, 2147483648
  %v95 = vor.u32 1.1754944e-38, %v94
  %v96 = vsel %vm93, %v95, %v91
  %v97 = vmul.f32 1.0, %v96
  %v98 = vmul.f32 %v55, %v82
  %v99 = vmul.f32 %v58, %v97
  %s100 = sshra.s32 %s14, 7
  %s101 = sand.u32 %s14, 127
  %s102 = scalar_lea.vmem %s0, %s100
  %v103 = vld [vmem:[%s102] sm:$0xff]
  %v104 = vld [vmem:[%s102 + $0x8] sm:$0xff]
  %v105 = vadd.f32 %v103, %v98
  %v106 = vadd.f32 %v104, %v99
  %107 = vst [vmem:[%s3] sm:$0xff] %v105
  %108 = vst [vmem:[%s3 + $0x8] sm:$0xff] %v106
  // Predicated region
  $region14: #{resblock_pallas.1} parent=0 // pred_check
    _
  $region15: #{resblock_pallas.1} parent=0 // pred_check_branch
    %110 = sbr.rel (0) target = $region17
  $region16: #{resblock_pallas.1} parent=0 // pred_region
    _
  $region17: #{resblock_pallas.1} parent=0 // pred_fallthru
    _
  // Predicated region
  $region18: #{resblock_pallas.1} parent=0 // pred_check
    _
  $region19: #{resblock_pallas.1} parent=0 // pred_check_branch
    %112 = sbr.rel (0) target = $region21
  $region20: #{resblock_pallas.1} parent=0 // pred_region
    _
  $region21: #{resblock_pallas.1} parent=0 // pred_fallthru
    _

</llo_original>
